<compile_context>
chip_gen: v5e
topology: v5e:2x2
jax: 0.10.0
libtpu: 0.0.40
codegen_flags: <defaults>
</compile_context>

<pallas_src>
import jax
import jax.numpy as jnp
from jax.experimental import pallas as pl
from jax.experimental.pallas import tpu as pltpu


# `pl.Squeezed()` when available (recent JAX); `None` is the equivalent legacy spelling.
_SQUEEZED = pl.Squeezed() if hasattr(pl, "Squeezed") else None


def _pick_tk(cin):
    """Pick an MXU-friendly Cin reduction tile (256/512-aligned when possible)."""
    for tk in (512, 256, 128):
        if cin % tk == 0 and cin // tk >= 2:
            return tk
    for tk in (512, 256, 128):
        if cin % tk == 0:
            return tk
    return cin


def _fusion_kernel(x_ref, w_ref, scale_ref, shift_ref, caw1_ref, caw2_ref,
                   o_ref, acc_ref):
    # x_ref:   (P, TK)    bf16   (batch dim squeezed away)
    # w_ref:   (TK, Cout) bf16
    # o_ref:   (P, Cout)
    # acc_ref: (P, Cout)  f32 VMEM scratch accumulator
    k = pl.program_id(1)

    @pl.when(k == 0)
    def _zero():
        acc_ref[...] = jnp.zeros_like(acc_ref)

    # Partial 1x1-conv matmul over this Cin tile (bf16 operands, f32 accumulate).
    acc_ref[...] += jnp.dot(x_ref[...], w_ref[...],
                            preferred_element_type=jnp.float32)

    @pl.when(k == pl.num_programs(1) - 1)
    def _epilogue():
        # Fused (inference) BatchNorm + ReLU, in f32.
        fuse = acc_ref[...] * scale_ref[...] + shift_ref[...]
        fuse = jnp.maximum(fuse, 0.0)                              # (P, Cout)

        # ChannelAttention: global avg / max pool over the (unpadded) P positions.
        avg = jnp.mean(fuse, axis=0, keepdims=True)                # (1, Cout)
        mx = jnp.max(fuse, axis=0, keepdims=True)                  # (1, Cout)
        pooled = jnp.concatenate([avg, mx], axis=0)                # (2, Cout)

        # Shared MLP applied to both pooled rows with a single pair of matmuls.
        h = jnp.dot(pooled, caw1_ref[...], preferred_element_type=jnp.float32)
        h = jnp.maximum(h, 0.0)
        z = jnp.dot(h, caw2_ref[...], preferred_element_type=jnp.float32)  # (2, Cout)
        ca = jax.nn.sigmoid(jnp.sum(z, axis=0, keepdims=True))             # (1, Cout)

        # fuse_fea = fuse_fea + fuse_fea * ca(fuse_fea)
        o_ref[...] = (fuse * (1.0 + ca)).astype(o_ref.dtype)


def feature_fusion_forward(x_nchw, params, *, out_dtype=None):
    """x_nchw: (N, Cin, H, W). Returns (N, Cout, H, W)."""
    N, Cin, H, W = x_nchw.shape
    P = H * W
    Cout = params["w_conv"].shape[1]
    hidden = params["ca_w1"].shape[1]
    out_dtype = x_nchw.dtype if out_dtype is None else out_dtype

    TK = _pick_tk(Cin)
    n_k = Cin // TK

    # NCHW -> (N, P, Cin); matmul operands cast to bf16 (f32 accumulation in kernel).
    x = jnp.transpose(x_nchw, (0, 2, 3, 1)).reshape(N, P, Cin).astype(jnp.bfloat16)
    w = params["w_conv"].astype(jnp.bfloat16)

    # Fold BN (inference) into per-channel scale / shift (kept in f32).
    eps = 1e-5
    scale = params["bn_gamma"] / jnp.sqrt(params["bn_var"] + eps)
    shift = params["bn_beta"] - params["bn_mean"] * scale
    scale = scale.reshape(1, Cout).astype(jnp.float32)
    shift = shift.reshape(1, Cout).astype(jnp.float32)
    ca_w1 = params["ca_w1"].astype(jnp.float32)
    ca_w2 = params["ca_w2"].astype(jnp.float32)

    out = pl.pallas_call(
        _fusion_kernel,
        out_shape=jax.ShapeDtypeStruct((N, P, Cout), out_dtype),
        grid_spec=pltpu.PrefetchScalarGridSpec(
            num_scalar_prefetch=0,
            grid=(N, n_k),
            in_specs=[
                # activations: one image, one Cin tile per step
                pl.BlockSpec((_SQUEEZED, P, TK), lambda n, k: (n, 0, k)),
                # conv weight: streamed K-tile (double-buffered by the pipeline)
                pl.BlockSpec((TK, Cout), lambda n, k: (k, 0)),
                # small constant-index params
                pl.BlockSpec((1, Cout), lambda n, k: (0, 0)),
                pl.BlockSpec((1, Cout), lambda n, k: (0, 0)),
                pl.BlockSpec((Cout, hidden), lambda n, k: (0, 0)),
                pl.BlockSpec((hidden, Cout), lambda n, k: (0, 0)),
            ],
            out_specs=pl.BlockSpec((_SQUEEZED, P, Cout), lambda n, k: (n, 0, 0)),
            scratch_shapes=[pltpu.VMEM((P, Cout), jnp.float32)],
        ),
        compiler_params=pltpu.CompilerParams(
            dimension_semantics=("parallel", "arbitrary"),
            vmem_limit_bytes=64 * 1024 * 1024,
        ),
    )(x, w, scale, shift, ca_w1, ca_w2)

    # (N, P, Cout) -> NCHW
    return jnp.transpose(out.reshape(N, H, W, Cout), (0, 3, 1, 2))


def feature_fusion_reference(x_nchw, params):
    """Pure-JAX f32 reference matching the PyTorch forward (eval-mode BN)."""
    N, Cin, H, W = x_nchw.shape
    Cout = params["w_conv"].shape[1]
    eps = 1e-5
    scale = params["bn_gamma"] / jnp.sqrt(params["bn_var"] + eps)
    shift = params["bn_beta"] - params["bn_mean"] * scale

    xr = jnp.transpose(x_nchw, (0, 2, 3, 1)).reshape(N, H * W, Cin)
    fuse = jnp.einsum("npc,cd->npd", xr, params["w_conv"])
    fuse = fuse * scale[None, None, :] + shift[None, None, :]
    fuse = jnp.maximum(fuse, 0.0)                                  # (N, P, Cout)

    avg = jnp.mean(fuse, axis=1)                                   # (N, Cout)
    mx = jnp.max(fuse, axis=1)                                     # (N, Cout)

    def mlp(v):
        h = jnp.maximum(v @ params["ca_w1"], 0.0)
        return h @ params["ca_w2"]

    ca = jax.nn.sigmoid(mlp(avg) + mlp(mx))                        # (N, Cout)
    out = fuse * (1.0 + ca[:, None, :])
    return jnp.transpose(out.reshape(N, H, W, Cout), (0, 3, 1, 2))


def make_params(key, in_chan, out_chan, ratio=16):
    hidden = out_chan // ratio
    k = jax.random.split(key, 7)
    return {
        # Conv2d(in_chan, out_chan, 1, bias=False): PyTorch weight (Cout, Cin, 1, 1),
        # stored here pre-transposed as (Cin, Cout).
        "w_conv": (jax.random.normal(k[0], (in_chan, out_chan), jnp.float32) * 0.05),
        "bn_gamma": 1.0 + 0.1 * jax.random.normal(k[1], (out_chan,), jnp.float32),
        "bn_beta": 0.1 * jax.random.normal(k[2], (out_chan,), jnp.float32),
        "bn_mean": 0.05 * jax.random.normal(k[3], (out_chan,), jnp.float32),
        "bn_var": 1.0 + 0.1 * jnp.abs(jax.random.normal(k[4], (out_chan,), jnp.float32)),
        # ChannelAttention shared MLP: Conv2d(C, C//16, 1) then Conv2d(C//16, C, 1), no bias
        "ca_w1": jax.random.normal(k[5], (out_chan, hidden), jnp.float32) * 0.1,
        "ca_w2": jax.random.normal(k[6], (hidden, out_chan), jnp.float32) * 0.1,
    }


if __name__ == "__main__":
    num_frames = 4
    N, out_chan, H, W = 2, 128, 8, 8
    in_chan = out_chan * num_frames  # mirrors in_chan = 2048*num_frames, out_chan = 2048

    key = jax.random.PRNGKey(0)
    kx, kp = jax.random.split(key)
    x = jax.random.normal(kx, (N, in_chan, H, W), jnp.float32)
    params = make_params(kp, in_chan, out_chan, ratio=16)

    out = feature_fusion_forward(x, params)
    out = jax.block_until_ready(out)

    ref = feature_fusion_reference(x, params)
    assert out.shape == (N, out_chan, H, W)
    # bf16 matmul operands (f32 accumulation) -> slightly looser tolerance vs f32 ref.
    assert jnp.allclose(out, ref, rtol=3e-2, atol=3e-2), "mismatch vs reference"

    print("KERNEL_OK")
</pallas_src>

<mosaic_0001>
module attributes {stable_mosaic.version = 11 : i64} {
  func.func @_fusion_kernel(%arg0: i32, %arg1: i32, %arg2: memref<1x64x256xbf16, #tpu.memory_space<vmem>>, %arg3: memref<256x128xbf16, #tpu.memory_space<vmem>>, %arg4: memref<1x128xf32, #tpu.memory_space<vmem>>, %arg5: memref<1x128xf32, #tpu.memory_space<vmem>>, %arg6: memref<128x8xf32, #tpu.memory_space<vmem>>, %arg7: memref<8x128xf32, #tpu.memory_space<vmem>>, %arg8: memref<1x64x128xf32, #tpu.memory_space<vmem>>, %arg9: memref<64x128xf32, #tpu.memory_space<vmem>>) attributes {dimension_semantics = [#tpu.dimension_semantics<parallel>, #tpu.dimension_semantics<arbitrary>], iteration_bounds = array<i64: 2, 2>, scalar_prefetch = 0 : i64, scratch_operands = 1 : i64, tpu.core_type = #tpu.core_type<tc>, window_params = [{transform_indices = @transform_0, window_bounds = array<i64: 1, 64, 256>}, {transform_indices = @transform_1, window_bounds = array<i64: 256, 128>}, {pipeline_mode = #tpu.pipeline_mode<synchronous>, transform_indices = @transform_2, window_bounds = array<i64: 1, 128>}, {pipeline_mode = #tpu.pipeline_mode<synchronous>, transform_indices = @transform_3, window_bounds = array<i64: 1, 128>}, {pipeline_mode = #tpu.pipeline_mode<synchronous>, transform_indices = @transform_4, window_bounds = array<i64: 128, 8>}, {pipeline_mode = #tpu.pipeline_mode<synchronous>, transform_indices = @transform_5, window_bounds = array<i64: 8, 128>}, {transform_indices = @transform_6, window_bounds = array<i64: 1, 64, 128>}]} {
    %c0_i32 = arith.constant 0 : i32
    %0 = arith.cmpi eq, %arg1, %c0_i32 : i32
    %1 = arith.extui %0 : i1 to i32
    %c0_i32_0 = arith.constant 0 : i32
    %2 = arith.cmpi ne, %1, %c0_i32_0 : i32
    scf.if %2 {
      %cst_10 = arith.constant 0.000000e+00 : f32
      %13 = vector.broadcast %cst_10 : f32 to vector<64x128xf32>
      %c0_11 = arith.constant 0 : index
      %c0_12 = arith.constant 0 : index
      %14 = vector.load %arg9[%c0_11, %c0_12] : memref<64x128xf32, #tpu.memory_space<vmem>>, vector<64x128xf32>
      tpu.vector_store %arg9[%c0_11, %c0_12], %13 {strides = array<i32>} : memref<64x128xf32, #tpu.memory_space<vmem>>, vector<64x128xf32>,
    } else {
    }
    %c0 = arith.constant 0 : index
    %c0_1 = arith.constant 0 : index
    %3 = vector.load %arg9[%c0, %c0_1] : memref<64x128xf32, #tpu.memory_space<vmem>>, vector<64x128xf32>
    %c0_2 = arith.constant 0 : index
    %c0_3 = arith.constant 0 : index
    %c0_4 = arith.constant 0 : index
    %4 = vector.load %arg2[%c0_2, %c0_3, %c0_4] : memref<1x64x256xbf16, #tpu.memory_space<vmem>>, vector<1x64x256xbf16>
    %5 = vector.shape_cast %4 : vector<1x64x256xbf16> to vector<64x256xbf16>
    %c0_5 = arith.constant 0 : index
    %c0_6 = arith.constant 0 : index
    %6 = vector.load %arg3[%c0_5, %c0_6] : memref<256x128xbf16, #tpu.memory_space<vmem>>, vector<256x128xbf16>
    %cst = arith.constant dense<0.000000e+00> : vector<64x128xf32>
    %7 = tpu.matmul %5, %6, %cst {dimension_numbers = #tpu.dot_dimension_numbers<[1], [0], [0], [1], [0, 0, 1, 1], [], []>} : vector<64x256xbf16>, vector<256x128xbf16>, vector<64x128xf32> -> vector<64x128xf32>
    %8 = arith.addf %3, %7 : vector<64x128xf32>
    %c0_7 = arith.constant 0 : index
    %c0_8 = arith.constant 0 : index
    %9 = vector.load %arg9[%c0_7, %c0_8] : memref<64x128xf32, #tpu.memory_space<vmem>>, vector<64x128xf32>
    tpu.vector_store %arg9[%c0_7, %c0_8], %8 {strides = array<i32>} : memref<64x128xf32, #tpu.memory_space<vmem>>, vector<64x128xf32>,
    %c1_i32 = arith.constant 1 : i32
    %10 = arith.cmpi eq, %arg1, %c1_i32 : i32
    %11 = arith.extui %10 : i1 to i32
    %c0_i32_9 = arith.constant 0 : i32
    %12 = arith.cmpi ne, %11, %c0_i32_9 : i32
    scf.if %12 {
      %c0_10 = arith.constant 0 : index
      %c0_11 = arith.constant 0 : index
      %13 = vector.load %arg9[%c0_10, %c0_11] : memref<64x128xf32, #tpu.memory_space<vmem>>, vector<64x128xf32>
      %c0_12 = arith.constant 0 : index
      %c0_13 = arith.constant 0 : index
      %14 = vector.load %arg4[%c0_12, %c0_13] : memref<1x128xf32, #tpu.memory_space<vmem>>, vector<1x128xf32>
      %15 = vector.broadcast %14 : vector<1x128xf32> to vector<64x128xf32>
      %16 = arith.mulf %13, %15 : vector<64x128xf32>
      %c0_14 = arith.constant 0 : index
      %c0_15 = arith.constant 0 : index
      %17 = vector.load %arg5[%c0_14, %c0_15] : memref<1x128xf32, #tpu.memory_space<vmem>>, vector<1x128xf32>
      %18 = vector.broadcast %17 : vector<1x128xf32> to vector<64x128xf32>
      %19 = arith.addf %16, %18 : vector<64x128xf32>
      %cst_16 = arith.constant 0.000000e+00 : f32
      %20 = vector.broadcast %cst_16 : f32 to vector<64x128xf32>
      %21 = arith.maximumf %19, %20 : vector<64x128xf32>
      %cst_17 = arith.constant dense<0.000000e+00> : vector<128xf32>
      %22 = vector.multi_reduction <add>, %21, %cst_17 [0] : vector<64x128xf32> to vector<128xf32>
      %23 = vector.shape_cast %22 : vector<128xf32> to vector<1x128xf32>
      %cst_18 = arith.constant 6.400000e+01 : f32
      %24 = vector.broadcast %cst_18 : f32 to vector<1x128xf32>
      %25 = arith.divf %23, %24 : vector<1x128xf32>
      %cst_19 = arith.constant dense<0xFF800000> : vector<128xf32>
      %26 = vector.multi_reduction <maximumf>, %21, %cst_19 [0] : vector<64x128xf32> to vector<128xf32>
      %27 = vector.shape_cast %26 : vector<128xf32> to vector<1x128xf32>
      %28 = tpu.concatenate %25, %27 in 0 : vector<1x128xf32>, vector<1x128xf32> -> vector<2x128xf32>
      %c0_20 = arith.constant 0 : index
      %c0_21 = arith.constant 0 : index
      %29 = vector.load %arg6[%c0_20, %c0_21] : memref<128x8xf32, #tpu.memory_space<vmem>>, vector<128x8xf32>
      %cst_22 = arith.constant dense<0.000000e+00> : vector<2x8xf32>
      %30 = tpu.matmul %28, %29, %cst_22 {dimension_numbers = #tpu.dot_dimension_numbers<[1], [0], [0], [1], [0, 0, 1, 1], [], []>} : vector<2x128xf32>, vector<128x8xf32>, vector<2x8xf32> -> vector<2x8xf32>
      %cst_23 = arith.constant 0.000000e+00 : f32
      %31 = vector.broadcast %cst_23 : f32 to vector<2x8xf32>
      %32 = arith.maximumf %30, %31 : vector<2x8xf32>
      %c0_24 = arith.constant 0 : index
      %c0_25 = arith.constant 0 : index
      %33 = vector.load %arg7[%c0_24, %c0_25] : memref<8x128xf32, #tpu.memory_space<vmem>>, vector<8x128xf32>
      %cst_26 = arith.constant dense<0.000000e+00> : vector<2x128xf32>
      %34 = tpu.matmul %32, %33, %cst_26 {dimension_numbers = #tpu.dot_dimension_numbers<[1], [0], [0], [1], [0, 0, 1, 1], [], []>} : vector<2x8xf32>, vector<8x128xf32>, vector<2x128xf32> -> vector<2x128xf32>
      %cst_27 = arith.constant dense<0.000000e+00> : vector<128xf32>
      %35 = vector.multi_reduction <add>, %34, %cst_27 [0] : vector<2x128xf32> to vector<128xf32>
      %36 = vector.shape_cast %35 : vector<128xf32> to vector<1x128xf32>
      %37 = arith.negf %36 : vector<1x128xf32>
      %38 = math.exp %37 : vector<1x128xf32>
      %cst_28 = arith.constant 1.000000e+00 : f32
      %39 = vector.broadcast %cst_28 : f32 to vector<1x128xf32>
      %40 = arith.addf %39, %38 : vector<1x128xf32>
      %41 = arith.divf %39, %40 : vector<1x128xf32>
      %cst_29 = arith.constant 1.000000e+00 : f32
      %42 = vector.broadcast %cst_29 : f32 to vector<1x128xf32>
      %43 = arith.addf %42, %41 : vector<1x128xf32>
      %44 = vector.broadcast %43 : vector<1x128xf32> to vector<64x128xf32>
      %45 = arith.mulf %21, %44 : vector<64x128xf32>
      %c0_30 = arith.constant 0 : index
      %c0_31 = arith.constant 0 : index
      %c0_32 = arith.constant 0 : index
      %46 = vector.load %arg8[%c0_30, %c0_31, %c0_32] : memref<1x64x128xf32, #tpu.memory_space<vmem>>, vector<1x64x128xf32>
      %47 = vector.shape_cast %46 : vector<1x64x128xf32> to vector<64x128xf32>
      %48 = vector.shape_cast %45 : vector<64x128xf32> to vector<1x64x128xf32>
      tpu.vector_store %arg8[%c0_30, %c0_31, %c0_32], %48 {strides = array<i32>} : memref<1x64x128xf32, #tpu.memory_space<vmem>>, vector<1x64x128xf32>,
    } else {
    }
    return
  }
  func.func @transform_0(%arg0: i32, %arg1: i32) -> (i32, i32, i32) {
    %c0_i32 = arith.constant 0 : i32
    %c0_i32_0 = arith.constant 0 : i32
    return %arg0, %c0_i32, %arg1 : i32, i32, i32
  }
  func.func @transform_1(%arg0: i32, %arg1: i32) -> (i32, i32) {
    %c0_i32 = arith.constant 0 : i32
    %c0_i32_0 = arith.constant 0 : i32
    return %arg1, %c0_i32 : i32, i32
  }
  func.func @transform_2(%arg0: i32, %arg1: i32) -> (i32, i32) {
    %c0_i32 = arith.constant 0 : i32
    %c0_i32_0 = arith.constant 0 : i32
    %c0_i32_1 = arith.constant 0 : i32
    return %c0_i32, %c0_i32_0 : i32, i32
  }
  func.func @transform_3(%arg0: i32, %arg1: i32) -> (i32, i32) {
    %c0_i32 = arith.constant 0 : i32
    %c0_i32_0 = arith.constant 0 : i32
    %c0_i32_1 = arith.constant 0 : i32
    return %c0_i32, %c0_i32_0 : i32, i32
  }
  func.func @transform_4(%arg0: i32, %arg1: i32) -> (i32, i32) {
    %c0_i32 = arith.constant 0 : i32
    %c0_i32_0 = arith.constant 0 : i32
    %c0_i32_1 = arith.constant 0 : i32
    return %c0_i32, %c0_i32_0 : i32, i32
  }
  func.func @transform_5(%arg0: i32, %arg1: i32) -> (i32, i32) {
    %c0_i32 = arith.constant 0 : i32
    %c0_i32_0 = arith.constant 0 : i32
    %c0_i32_1 = arith.constant 0 : i32
    return %c0_i32, %c0_i32_0 : i32, i32
  }
  func.func @transform_6(%arg0: i32, %arg1: i32) -> (i32, i32, i32) {
    %c0_i32 = arith.constant 0 : i32
    %c0_i32_0 = arith.constant 0 : i32
    %c0_i32_1 = arith.constant 0 : i32
    return %arg0, %c0_i32, %c0_i32_0 : i32, i32, i32
  }
}

</mosaic_0001>

<llo_original>
// kernel: tpu_custom_call.1
$region0: #{tpu_custom_call.1}
  #allocation0 [shape = 'u32[]', space=smem, size = 0x4, offset = 0x4, fixed_abs, tag = 'smem constant byte address 0x4 - core index']
  #allocation1 [shape = 'u32[72,128]{1,0:T(1,128)}', space=vmem, size = 0x9000, scoped, tag = 'internal scratch']
  #allocation2 [shape = 'f32[64,128]{1,0:T(8,128)}', space=vmem, size = 0x8000, scoped, tag = 'scratch operand']
  %s0 = inlined_call_operand.hbm [shape: bf16[2,64,512], index: 0, kind: input, shape index: {}]
  %s1 = inlined_call_operand.hbm [shape: bf16[512,128], index: 1, kind: input, shape index: {}]
  %s2 = inlined_call_operand.vmem [shape: f32[1,128], index: 2, kind: input, shape index: {}]
  %s3 = inlined_call_operand.vmem [shape: f32[1,128], index: 3, kind: input, shape index: {}]
  %s4 = inlined_call_operand.vmem [shape: f32[128,8], index: 4, kind: input, shape index: {}]
  %s5 = inlined_call_operand.vmem [shape: f32[8,128], index: 5, kind: input, shape index: {}]
  %s6 = inlined_call_operand.hbm [shape: f32[2,64,128], index: 6, kind: output, shape index: {}]
  %s7 = sld [smem:[#allocation0]]
  $region73: #{tpu_custom_call.1} parent=0
    _
  %s9 = ssub.s32 1, %s7
  %s10 = scalar_select 0, %s9, %s7
  $region1: #{tpu_custom_call.1} parent=0
    #allocation3 [shape = 'u8[65536]{0}', space=vmem, size = 0x10000, scoped, tag = 'input window, operand 0']
    #allocation4 [shape = 's32[2]{0}', space=sflag, size = 0x8, scoped, tag = 'scoped memory for tpu_custom_call.1']
    #allocation5 [shape = 's32[2]{0}', space=sflag, size = 0x8, scoped, tag = 'scoped memory for tpu_custom_call.1']
    #allocation6 [shape = 'u8[131072]{0}', space=vmem, size = 0x20000, scoped, tag = 'input window, operand 1']
    #allocation7 [shape = 's32[2]{0}', space=sflag, size = 0x8, scoped, tag = 'scoped memory for tpu_custom_call.1']
    #allocation8 [shape = 'u8[65536]{0}', space=vmem, size = 0x10000, scoped, tag = 'output window, operand 0']
    %11 = vsyncpa [#allocation4], 0
    %s12 = scalar_lea.sflag [#allocation4], 1
    %13 = vsyncpa %s12, 0
    %14 = vsyncpa [#allocation7], 0
    %s15 = scalar_lea.sflag [#allocation7], 1
    %16 = vsyncpa %s15, 0
    %17 = vsyncpa [#allocation5], 0
    %s18 = scalar_lea.sflag [#allocation5], 1
    %19 = vsyncpa %s18, 0
    loop: start=0, step=1, limit=6
    $region2: #{tpu_custom_call.1} parent=1 // loop_pre_header
      _
    $region3: #{tpu_custom_call.1} parent=1 // loop_header
      %s21 = sphi 0, %s25
      %p22 = scmp.ge.s32.totalorder %s21, 6
      %s28 = sphi 0, %s40
      %s29 = sphi 0, %s36
      %s30 = sphi 0, %s28
      %s31 = sphi 0, %s29
      %s32 = sphi 0, %s30
      %s33 = sphi 0, %s31
      %s45 = sphi 0, %s47
      %s48 = sphi 0, %s45
      %s49 = sphi 0, %s48
      %s65 = sphi 0, %s49
      %s71 = sphi 0, %s73
      %s74 = sphi 0, %s71
      %s75 = sphi 0, %s74
      %s91 = sphi 0, %s75
      %s95 = sphi 0, %s95
      %s97 = sphi 0, %s95
      %s98 = sphi 0, %s97
      %s112 = sphi 0, %s98
      %s116 = sphi 0, %s116
      %s118 = sphi 0, %s116
      %s119 = sphi 0, %s118
      %s133 = sphi 0, %s119
      %s137 = sphi 0, %s137
      %s139 = sphi 0, %s137
      %s140 = sphi 0, %s139
      %s154 = sphi 0, %s140
      %s158 = sphi 0, %s158
      %s160 = sphi 0, %s158
      %s161 = sphi 0, %s160
      %s175 = sphi 0, %s161
      %s181 = sphi 0, %s183
      %s184 = sphi 0, %s181
      %s185 = sphi 0, %s184
      %s201 = sphi 0, %s185
    $region4: #{tpu_custom_call.1} parent=1 // loop_header_branch
      %24 = sbr.rel (%p22) target = $region8
    $region5: #{tpu_custom_call.1} parent=1 // loop_body
      %s26 = ssub.s32 %s21, 1
      %s27 = ssub.s32 %s21, 2
      %s34 = sadd.s32 1, %s29
      %p35 = scmp.ge.s32.totalorder %s34, 2
      %s36 = scalar_select %p35, 0, %s34
      %s37 = sadd.s32 1, %s28
      %s38 = scalar_select %p35, %s37, %s28
      %p39 = scmp.ge.s32.totalorder %s38, 2
      %s40 = scalar_select %p39, 0, %s38
      %s41 = ssub.s32 %s28, %s40
      %s42 = ssub.s32 %s29, %s36
      %s43 = sor.u32 %s41, %s42
      %p44 = scmp.eq.s32.totalorder %s43, 0
      %s46 = sadd.s32 %s45, 1
      %s47 = scalar_select %p44, %s45, %s46
      %p50 = pneg %p44
      %p51 = scmp.eq.s32.totalorder %s21, 3
      %p52 = por %p50, %p51
      %p53 = scmp.ne.s32.totalorder %s45, %s48
      %p54 = scmp.eq.s32.totalorder %s21, 0
      %p55 = por %p53, %p54
      %p56 = scmp.ne.s32.totalorder %s45, %s48
      %p57 = scmp.eq.s32.totalorder %s26, 3
      %p58 = por %p56, %p57
      %p59 = scmp.ne.s32.totalorder %s48, %s49
      %p60 = scmp.eq.s32.totalorder %s26, 0
      %p61 = por %p59, %p60
      %p62 = scmp.ne.s32.totalorder %s48, %s49
      %p63 = scmp.eq.s32.totalorder %s27, 3
      %p64 = por %p62, %p63
      %p66 = scmp.ne.s32.totalorder %s49, %s65
      %p67 = scmp.eq.s32.totalorder %s27, 0
      %p68 = por %p66, %p67
      %s69 = ssub.s32 %s29, %s36
      %p70 = scmp.eq.s32.totalorder %s69, 0
      %s72 = sadd.s32 %s71, 1
      %s73 = scalar_select %p70, %s71, %s72
      %p76 = pneg %p70
      %p77 = scmp.eq.s32.totalorder %s21, 3
      %p78 = por %p76, %p77
      %p79 = scmp.ne.s32.totalorder %s71, %s74
      %p80 = scmp.eq.s32.totalorder %s21, 0
      %p81 = por %p79, %p80
      %p82 = scmp.ne.s32.totalorder %s71, %s74
      %p83 = scmp.eq.s32.totalorder %s26, 3
      %p84 = por %p82, %p83
      %p85 = scmp.ne.s32.totalorder %s74, %s75
      %p86 = scmp.eq.s32.totalorder %s26, 0
      %p87 = por %p85, %p86
      %p88 = scmp.ne.s32.totalorder %s74, %s75
      %p89 = scmp.eq.s32.totalorder %s27, 3
      %p90 = por %p88, %p89
      %p92 = scmp.ne.s32.totalorder %s75, %s91
      %p93 = scmp.eq.s32.totalorder %s27, 0
      %p94 = por %p92, %p93
      %s96 = sadd.s32 %s95, 1
      %p99 = scmp.eq.s32.totalorder %s21, 3
      %p100 = scmp.ne.s32.totalorder %s95, %s97
      %p101 = scmp.eq.s32.totalorder %s21, 0
      %p102 = por %p100, %p101
      %p103 = scmp.ne.s32.totalorder %s95, %s97
      %p104 = scmp.eq.s32.totalorder %s26, 3
      %p105 = por %p103, %p104
      %p106 = scmp.ne.s32.totalorder %s97, %s98
      %p107 = scmp.eq.s32.totalorder %s26, 0
      %p108 = por %p106, %p107
      %p109 = scmp.ne.s32.totalorder %s97, %s98
      %p110 = scmp.eq.s32.totalorder %s27, 3
      %p111 = por %p109, %p110
      %p113 = scmp.ne.s32.totalorder %s98, %s112
      %p114 = scmp.eq.s32.totalorder %s27, 0
      %p115 = por %p113, %p114
      %s117 = sadd.s32 %s116, 1
      %p120 = scmp.eq.s32.totalorder %s21, 3
      %p121 = scmp.ne.s32.totalorder %s116, %s118
      %p122 = scmp.eq.s32.totalorder %s21, 0
      %p123 = por %p121, %p122
      %p124 = scmp.ne.s32.totalorder %s116, %s118
      %p125 = scmp.eq.s32.totalorder %s26, 3
      %p126 = por %p124, %p125
      %p127 = scmp.ne.s32.totalorder %s118, %s119
      %p128 = scmp.eq.s32.totalorder %s26, 0
      %p129 = por %p127, %p128
      %p130 = scmp.ne.s32.totalorder %s118, %s119
      %p131 = scmp.eq.s32.totalorder %s27, 3
      %p132 = por %p130, %p131
      %p134 = scmp.ne.s32.totalorder %s119, %s133
      %p135 = scmp.eq.s32.totalorder %s27, 0
      %p136 = por %p134, %p135
      %s138 = sadd.s32 %s137, 1
      %p141 = scmp.eq.s32.totalorder %s21, 3
      %p142 = scmp.ne.s32.totalorder %s137, %s139
      %p143 = scmp.eq.s32.totalorder %s21, 0
      %p144 = por %p142, %p143
      %p145 = scmp.ne.s32.totalorder %s137, %s139
      %p146 = scmp.eq.s32.totalorder %s26, 3
      %p147 = por %p145, %p146
      %p148 = scmp.ne.s32.totalorder %s139, %s140
      %p149 = scmp.eq.s32.totalorder %s26, 0
      %p150 = por %p148, %p149
      %p151 = scmp.ne.s32.totalorder %s139, %s140
      %p152 = scmp.eq.s32.totalorder %s27, 3
      %p153 = por %p151, %p152
      %p155 = scmp.ne.s32.totalorder %s140, %s154
      %p156 = scmp.eq.s32.totalorder %s27, 0
      %p157 = por %p155, %p156
      %s159 = sadd.s32 %s158, 1
      %p162 = scmp.eq.s32.totalorder %s21, 3
      %p163 = scmp.ne.s32.totalorder %s158, %s160
      %p164 = scmp.eq.s32.totalorder %s21, 0
      %p165 = por %p163, %p164
      %p166 = scmp.ne.s32.totalorder %s158, %s160
      %p167 = scmp.eq.s32.totalorder %s26, 3
      %p168 = por %p166, %p167
      %p169 = scmp.ne.s32.totalorder %s160, %s161
      %p170 = scmp.eq.s32.totalorder %s26, 0
      %p171 = por %p169, %p170
      %p172 = scmp.ne.s32.totalorder %s160, %s161
      %p173 = scmp.eq.s32.totalorder %s27, 3
      %p174 = por %p172, %p173
      %p176 = scmp.ne.s32.totalorder %s161, %s175
      %p177 = scmp.eq.s32.totalorder %s27, 0
      %p178 = por %p176, %p177
      %s179 = ssub.s32 %s28, %s40
      %p180 = scmp.eq.s32.totalorder %s179, 0
      %s182 = sadd.s32 %s181, 1
      %s183 = scalar_select %p180, %s181, %s182
      %p186 = pneg %p180
      %p187 = scmp.eq.s32.totalorder %s21, 3
      %p188 = por %p186, %p187
      %p189 = scmp.ne.s32.totalorder %s181, %s184
      %p190 = scmp.eq.s32.totalorder %s21, 0
      %p191 = por %p189, %p190
      %p192 = scmp.ne.s32.totalorder %s181, %s184
      %p193 = scmp.eq.s32.totalorder %s26, 3
      %p194 = por %p192, %p193
      %p195 = scmp.ne.s32.totalorder %s184, %s185
      %p196 = scmp.eq.s32.totalorder %s26, 0
      %p197 = por %p195, %p196
      %p198 = scmp.ne.s32.totalorder %s184, %s185
      %p199 = scmp.eq.s32.totalorder %s27, 3
      %p200 = por %p198, %p199
      %p202 = scmp.ne.s32.totalorder %s185, %s201
      %p203 = scmp.eq.s32.totalorder %s27, 0
      %p204 = por %p202, %p203
      %p205 = scmp.le.s32.totalorder 1, %s21
      %p206 = scmp.lt.s32.totalorder %s21, 5
      %p207 = pnand %p205, %p206
      %p208 = pneg %p207
      // Predicated region
      $region9: #{tpu_custom_call.1} parent=5 // pred_check
        _
      $region10: #{tpu_custom_call.1} parent=5 // pred_check_branch
        %210 = sbr.rel (%p207) target = $region12
      $region11: #{tpu_custom_call.1} parent=5 // pred_region
        %s211 = ssub.s32 %s21, 1
        // Predicated region
        $region13: #{tpu_custom_call.1} parent=11 // pred_check
          %p212 = pneg %p108
        $region14: #{tpu_custom_call.1} parent=11 // pred_check_branch
          %214 = sbr.rel (%p212) target = $region16
        $region15: #{tpu_custom_call.1} parent=11 // pred_region
          _
        $region16: #{tpu_custom_call.1} parent=11 // pred_fallthru
          _
        // Predicated region
        $region17: #{tpu_custom_call.1} parent=11 // pred_check
          %p215 = pneg %p129
        $region18: #{tpu_custom_call.1} parent=11 // pred_check_branch
          %217 = sbr.rel (%p215) target = $region20
        $region19: #{tpu_custom_call.1} parent=11 // pred_region
          _
        $region20: #{tpu_custom_call.1} parent=11 // pred_fallthru
          _
        // Predicated region
        $region21: #{tpu_custom_call.1} parent=11 // pred_check
          %p218 = pneg %p150
        $region22: #{tpu_custom_call.1} parent=11 // pred_check_branch
          %220 = sbr.rel (%p218) target = $region24
        $region23: #{tpu_custom_call.1} parent=11 // pred_region
          _
        $region24: #{tpu_custom_call.1} parent=11 // pred_fallthru
          _
        // Predicated region
        $region25: #{tpu_custom_call.1} parent=11 // pred_check
          %p221 = pneg %p171
        $region26: #{tpu_custom_call.1} parent=11 // pred_check_branch
          %223 = sbr.rel (%p221) target = $region28
        $region27: #{tpu_custom_call.1} parent=11 // pred_region
          _
        $region28: #{tpu_custom_call.1} parent=11 // pred_fallthru
          _
      $region12: #{tpu_custom_call.1} parent=5 // pred_fallthru
        _
      %p224 = scmp.lt.s32.totalorder %s21, 4
      // Predicated region
      $region29: #{tpu_custom_call.1} parent=5 // pred_check
        %p225 = pneg %p224
      $region30: #{tpu_custom_call.1} parent=5 // pred_check_branch
        %227 = sbr.rel (%p225) target = $region32
      $region31: #{tpu_custom_call.1} parent=5 // pred_region
        // Predicated region
        $region33: #{tpu_custom_call.1} parent=31 // pred_check
          %p228 = pneg %p55
        $region34: #{tpu_custom_call.1} parent=31 // pred_check_branch
          %230 = sbr.rel (%p228) target = $region36
        $region35: #{tpu_custom_call.1} parent=31 // pred_region
          %s231 = sand.u32 %s45, 1
          %s232 = scalar_lea.sflag [#allocation4], %s231
          %s233 = sand.u32 %s45, 1
          %s234 = smul.addr %s233, 64
          %s235 = scalar_lea.vmem [#allocation3], %s234
          %s236 = smul.u32 2, %s29
          %238 = vsyncadd %s232, 0
          %s239 = smul.addr %s28, 32
          %s240 = sadd.s32 %s236, %s239
          %s241 = smul.addr %s240, 4
          %s242 = scalar_lea.hbm %s0, %s241
          %s243 = sshll.u32 %s242, 4
          %s244 = int_to_ptr.hbm [resolvable:$true] %s243
          %s245 = sshll.u32 %s235, 4
          %s246 = int_to_ptr.vmem [resolvable:$true] %s245
          %251 = dma.hbm_to_vmem [thread:$0]  %s244, 1024, %s246, %s232, 256, 128, 8
        $region36: #{tpu_custom_call.1} parent=31 // pred_fallthru
          _
        // Predicated region
        $region37: #{tpu_custom_call.1} parent=31 // pred_check
          %p252 = pneg %p81
        $region38: #{tpu_custom_call.1} parent=31 // pred_check_branch
          %254 = sbr.rel (%p252) target = $region40
        $region39: #{tpu_custom_call.1} parent=31 // pred_region
          %s255 = sand.u32 %s71, 1
          %s256 = scalar_lea.sflag [#allocation7], %s255
          %s257 = sand.u32 %s71, 1
          %s258 = smul.addr %s257, 128
          %s259 = scalar_lea.vmem [#allocation6], %s258
          %s260 = smul.u32 32, %s29
          %262 = vsyncadd %s256, 0
          %s263 = smul.addr %s260, 4
          %s264 = scalar_lea.hbm %s1, %s263
          %s265 = sshll.u32 %s264, 4
          %s266 = int_to_ptr.hbm [resolvable:$true] %s265
          %s267 = sshll.u32 %s259, 4
          %s268 = int_to_ptr.vmem [resolvable:$true] %s267
          %273 = dma.hbm_to_vmem [thread:$0]  %s266, 2048, %s268, %s256, 64, 64, 4
        $region40: #{tpu_custom_call.1} parent=31 // pred_fallthru
          _
      $region32: #{tpu_custom_call.1} parent=5 // pred_fallthru
        _
      %p274 = scmp.le.s32.totalorder 1, %s21
      %p275 = scmp.lt.s32.totalorder %s21, 5
      %p276 = pnand %p274, %p275
      %p277 = pneg %p276
      // Predicated region
      $region41: #{tpu_custom_call.1} parent=5 // pred_check
        _
      $region42: #{tpu_custom_call.1} parent=5 // pred_check_branch
        %279 = sbr.rel (%p276) target = $region44
      $region43: #{tpu_custom_call.1} parent=5 // pred_region
        %s280 = ssub.s32 %s21, 1
        %s281 = sand.u32 %s48, 1
        %s282 = scalar_lea.sflag [#allocation4], %s281
        %s283 = sand.u32 %s48, 1
        %s284 = smul.addr %s283, 64
        %s285 = scalar_lea.vmem [#allocation3], %s284
        // Predicated region
        $region45: #{tpu_custom_call.1} parent=43 // pred_check
          %p286 = pneg %p61
        $region46: #{tpu_custom_call.1} parent=43 // pred_check_branch
          %288 = sbr.rel (%p286) target = $region48
        $region47: #{tpu_custom_call.1} parent=43 // pred_region
          %290 = dma.done %s282, 1024
        $region48: #{tpu_custom_call.1} parent=43 // pred_fallthru
          _
        %s291 = sand.u32 %s74, 1
        %s292 = scalar_lea.sflag [#allocation7], %s291
        %s293 = sand.u32 %s74, 1
        %s294 = smul.addr %s293, 128
        %s295 = scalar_lea.vmem [#allocation6], %s294
        // Predicated region
        $region49: #{tpu_custom_call.1} parent=43 // pred_check
          %p296 = pneg %p87
        $region50: #{tpu_custom_call.1} parent=43 // pred_check_branch
          %298 = sbr.rel (%p296) target = $region52
        $region51: #{tpu_custom_call.1} parent=43 // pred_region
          %300 = dma.done %s292, 2048
        $region52: #{tpu_custom_call.1} parent=43 // pred_fallthru
          _
        %s301 = sand.u32 %s48, 1
        %s302 = scalar_lea.sflag [#allocation4], %s301
        %s303 = sand.u32 %s48, 1
        %s304 = smul.addr %s303, 64
        %s305 = scalar_lea.vmem [#allocation3], %s304
        %p306 = pneg %p61
        %p307 = pneg %p58
        %s308 = sand.u32 %s74, 1
        %s309 = scalar_lea.sflag [#allocation7], %s308
        %s310 = sand.u32 %s74, 1
        %s311 = smul.addr %s310, 128
        %s312 = scalar_lea.vmem [#allocation6], %s311
        %p313 = pneg %p87
        %p314 = pneg %p84
        %p315 = pneg %p108
        %p316 = pneg %p105
        %p317 = pneg %p129
        %p318 = pneg %p126
        %p319 = pneg %p150
        %p320 = pneg %p147
        %p321 = pneg %p171
        %p322 = pneg %p168
        %p323 = pneg %p197
        %p324 = pneg %p194
        %s325 = sand.u32 %s184, 1
        %s326 = scalar_lea.sflag [#allocation5], %s325
        %s327 = sand.u32 %s184, 1
        %s328 = smul.addr %s327, 64
        %s329 = scalar_lea.vmem [#allocation8], %s328
        %s330 = smul.u32 2, %s31
        %s331 = smul.u32 32, %s31
        %p332 = scmp.eq.s32.totalorder %s31, 0
        // Predicated region
        $region53: #{tpu_custom_call.1} parent=43 // pred_check
          %p333 = pneg %p332
        $region54: #{tpu_custom_call.1} parent=43 // pred_check_branch
          %335 = sbr.rel (%p333) target = $region56
        $region55: #{tpu_custom_call.1} parent=43 // pred_region
          %336 = vst [vmem:[#allocation2] sm:$0xff] 0.0
          %337 = vst [vmem:[#allocation2 + $0x8] sm:$0xff] 0.0
          %338 = vst [vmem:[#allocation2 + $0x10] sm:$0xff] 0.0
          %339 = vst [vmem:[#allocation2 + $0x18] sm:$0xff] 0.0
          %340 = vst [vmem:[#allocation2 + $0x20] sm:$0xff] 0.0
          %341 = vst [vmem:[#allocation2 + $0x28] sm:$0xff] 0.0
          %342 = vst [vmem:[#allocation2 + $0x30] sm:$0xff] 0.0
          %343 = vst [vmem:[#allocation2 + $0x38] sm:$0xff] 0.0
        $region56: #{tpu_custom_call.1} parent=43 // pred_fallthru
          _
        %v344 = vld [vmem:[#allocation2] sm:$0xff]
        %v345 = vld [vmem:[#allocation2 + $0x8] sm:$0xff]
        %v346 = vld [vmem:[#allocation2 + $0x10] sm:$0xff]
        %v347 = vld [vmem:[#allocation2 + $0x18] sm:$0xff]
        %v348 = vld [vmem:[#allocation2 + $0x20] sm:$0xff]
        %v349 = vld [vmem:[#allocation2 + $0x28] sm:$0xff]
        %v350 = vld [vmem:[#allocation2 + $0x30] sm:$0xff]
        %v351 = vld [vmem:[#allocation2 + $0x38] sm:$0xff]
        %v352 = vld [vmem:[%s285] sm:$0xff]
        %v353 = vld [vmem:[%s285 + $0x8] sm:$0xff]
        %v354 = vld [vmem:[%s285 + $0x10] sm:$0xff]
        %v355 = vld [vmem:[%s285 + $0x18] sm:$0xff]
        %v356 = vld [vmem:[%s285 + $0x20] sm:$0xff]
        %v357 = vld [vmem:[%s285 + $0x28] sm:$0xff]
        %v358 = vld [vmem:[%s285 + $0x30] sm:$0xff]
        %v359 = vld [vmem:[%s285 + $0x38] sm:$0xff]
        %v360 = vld [vmem:[%s295] sm:$0xf]
        %v361 = vld [vmem:[%s295 + $0x4] sm:$0xf]
        %v362 = vld [vmem:[%s295 + $0x8] sm:$0xf]
        %v363 = vld [vmem:[%s295 + $0xc] sm:$0xf]
        %v364 = vld [vmem:[%s295 + $0x10] sm:$0xf]
        %v365 = vld [vmem:[%s295 + $0x14] sm:$0xf]
        %v366 = vld [vmem:[%s295 + $0x18] sm:$0xf]
        %v367 = vld [vmem:[%s295 + $0x1c] sm:$0xf]
        %v368 = vld [vmem:[%s295 + $0x20] sm:$0xf]
        %v369 = vld [vmem:[%s295 + $0x24] sm:$0xf]
        %v370 = vld [vmem:[%s295 + $0x28] sm:$0xf]
        %v371 = vld [vmem:[%s295 + $0x2c] sm:$0xf]
        %v372 = vld [vmem:[%s295 + $0x30] sm:$0xf]
        %v373 = vld [vmem:[%s295 + $0x34] sm:$0xf]
        %v374 = vld [vmem:[%s295 + $0x38] sm:$0xf]
        %v375 = vld [vmem:[%s295 + $0x3c] sm:$0xf]
        %v376 = vld [vmem:[%s295 + $0x40] sm:$0xf]
        %v377 = vld [vmem:[%s295 + $0x44] sm:$0xf]
        %v378 = vld [vmem:[%s295 + $0x48] sm:$0xf]
        %v379 = vld [vmem:[%s295 + $0x4c] sm:$0xf]
        %v380 = vld [vmem:[%s295 + $0x50] sm:$0xf]
        %v381 = vld [vmem:[%s295 + $0x54] sm:$0xf]
        %v382 = vld [vmem:[%s295 + $0x58] sm:$0xf]
        %v383 = vld [vmem:[%s295 + $0x5c] sm:$0xf]
        %v384 = vld [vmem:[%s295 + $0x60] sm:$0xf]
        %v385 = vld [vmem:[%s295 + $0x64] sm:$0xf]
        %v386 = vld [vmem:[%s295 + $0x68] sm:$0xf]
        %v387 = vld [vmem:[%s295 + $0x6c] sm:$0xf]
        %v388 = vld [vmem:[%s295 + $0x70] sm:$0xf]
        %v389 = vld [vmem:[%s295 + $0x74] sm:$0xf]
        %v390 = vld [vmem:[%s295 + $0x78] sm:$0xf]
        %v391 = vld [vmem:[%s295 + $0x7c] sm:$0xf]
        %v400 = vunpack.c.l.b16 %v352
        %v401 = vunpack.c.h.b16 %v352
        %v402 = vunpack.c.l.b16 %v353
        %v403 = vunpack.c.h.b16 %v353
        %v404 = vunpack.c.l.b16 %v354
        %v405 = vunpack.c.h.b16 %v354
        %v406 = vunpack.c.l.b16 %v355
        %v407 = vunpack.c.h.b16 %v355
        %v408 = vunpack.c.l.b16 %v356
        %v409 = vunpack.c.h.b16 %v356
        %v410 = vunpack.c.l.b16 %v357
        %v411 = vunpack.c.h.b16 %v357
        %v412 = vunpack.c.l.b16 %v358
        %v413 = vunpack.c.h.b16 %v358
        %v414 = vunpack.c.l.b16 %v359
        %v415 = vunpack.c.h.b16 %v359
        %v416 = vpack.c.b16 %v402, %v400
        %v417 = vpack.c.b16 %v403, %v401
        %v418 = vpack.c.b16 %v406, %v404
        %v419 = vpack.c.b16 %v407, %v405
        %v420 = vpack.c.b16 %v410, %v408
        %v421 = vpack.c.b16 %v411, %v409
        %v422 = vpack.c.b16 %v414, %v412
        %v423 = vpack.c.b16 %v415, %v413
        %v464 = vunpack.c.l.b16 %v360
        %v465 = vunpack.c.l.b16 %v361
        %v466 = vunpack.c.l.b16 %v362
        %v467 = vunpack.c.l.b16 %v363
        %v468 = vunpack.c.l.b16 %v364
        %v469 = vunpack.c.l.b16 %v365
        %v470 = vunpack.c.l.b16 %v366
        %v471 = vunpack.c.l.b16 %v367
        %v472 = vunpack.c.l.b16 %v368
        %v473 = vunpack.c.l.b16 %v369
        %v474 = vunpack.c.l.b16 %v370
        %v475 = vunpack.c.l.b16 %v371
        %v476 = vunpack.c.l.b16 %v372
        %v477 = vunpack.c.l.b16 %v373
        %v478 = vunpack.c.l.b16 %v374
        %v479 = vunpack.c.l.b16 %v375
        %v480 = vunpack.c.l.b16 %v376
        %v481 = vunpack.c.l.b16 %v377
        %v482 = vunpack.c.l.b16 %v378
        %v483 = vunpack.c.l.b16 %v379
        %v484 = vunpack.c.l.b16 %v380
        %v485 = vunpack.c.l.b16 %v381
        %v486 = vunpack.c.l.b16 %v382
        %v487 = vunpack.c.l.b16 %v383
        %v488 = vunpack.c.l.b16 %v384
        %v489 = vunpack.c.l.b16 %v385
        %v490 = vunpack.c.l.b16 %v386
        %v491 = vunpack.c.l.b16 %v387
        %v492 = vunpack.c.l.b16 %v388
        %v493 = vunpack.c.l.b16 %v389
        %v494 = vunpack.c.l.b16 %v390
        %v495 = vunpack.c.l.b16 %v391
        %v496 = vpack.c.b16 %v465, %v464
        %v497 = vpack.c.b16 %v467, %v466
        %v498 = vpack.c.b16 %v469, %v468
        %v499 = vpack.c.b16 %v471, %v470
        %v500 = vpack.c.b16 %v473, %v472
        %v501 = vpack.c.b16 %v475, %v474
        %v502 = vpack.c.b16 %v477, %v476
        %v503 = vpack.c.b16 %v479, %v478
        %v504 = vpack.c.b16 %v481, %v480
        %v505 = vpack.c.b16 %v483, %v482
        %v506 = vpack.c.b16 %v485, %v484
        %v507 = vpack.c.b16 %v487, %v486
        %v508 = vpack.c.b16 %v489, %v488
        %v509 = vpack.c.b16 %v491, %v490
        %v510 = vpack.c.b16 %v493, %v492
        %v511 = vpack.c.b16 %v495, %v494
        %528 = vmatpush.bf16.msra.mxu0 %v503
        %529 = vmatpush.bf16.msra.mxu0 %v502
        %530 = vmatpush.bf16.msra.mxu0 %v501
        %531 = vmatpush.bf16.msra.mxu0 %v500
        %532 = vmatpush.bf16.msra.mxu0 %v499
        %533 = vmatpush.bf16.msra.mxu0 %v498
        %534 = vmatpush.bf16.msra.mxu0 %v497
        %535 = vmatpush.bf16.msra.mxu0 %v496
        %536 = vmatmul.bf16.gmra.mxu0 %v416
        %v537 = vpop.f32.mrf.mxu0
        %v538 = vadd.f32 0.0, %v537
        %v539 = vpop.f32.mrf.mxu0
        %v540 = vadd.f32 0.0, %v539
        %541 = vmatmul.bf16.gmra.mxu0 %v418
        %v542 = vpop.f32.mrf.mxu0
        %v543 = vadd.f32 0.0, %v542
        %v544 = vpop.f32.mrf.mxu0
        %v545 = vadd.f32 0.0, %v544
        %546 = vmatmul.bf16.gmra.mxu0 %v420
        %v547 = vpop.f32.mrf.mxu0
        %v548 = vadd.f32 0.0, %v547
        %v549 = vpop.f32.mrf.mxu0
        %v550 = vadd.f32 0.0, %v549
        %551 = vmatmul.bf16.gmra.mxu0 %v422
        %v552 = vpop.f32.mrf.mxu0
        %v553 = vadd.f32 0.0, %v552
        %v554 = vpop.f32.mrf.mxu0
        %v555 = vadd.f32 0.0, %v554
        %556 = vdwg.mxu0
        %557 = vmatpush.bf16.msra.mxu0 %v511
        %558 = vmatpush.bf16.msra.mxu0 %v510
        %559 = vmatpush.bf16.msra.mxu0 %v509
        %560 = vmatpush.bf16.msra.mxu0 %v508
        %561 = vmatpush.bf16.msra.mxu0 %v507
        %562 = vmatpush.bf16.msra.mxu0 %v506
        %563 = vmatpush.bf16.msra.mxu0 %v505
        %564 = vmatpush.bf16.msra.mxu0 %v504
        %565 = vmatmul.bf16.gmra.mxu0 %v417
        %v566 = vpop.f32.mrf.mxu0
        %v567 = vadd.f32 %v538, %v566
        %v568 = vpop.f32.mrf.mxu0
        %v569 = vadd.f32 %v540, %v568
        %570 = vmatmul.bf16.gmra.mxu0 %v419
        %v571 = vpop.f32.mrf.mxu0
        %v572 = vadd.f32 %v543, %v571
        %v573 = vpop.f32.mrf.mxu0
        %v574 = vadd.f32 %v545, %v573
        %575 = vmatmul.bf16.gmra.mxu0 %v421
        %v576 = vpop.f32.mrf.mxu0
        %v577 = vadd.f32 %v548, %v576
        %v578 = vpop.f32.mrf.mxu0
        %v579 = vadd.f32 %v550, %v578
        %580 = vmatmul.bf16.gmra.mxu0 %v423
        %v581 = vpop.f32.mrf.mxu0
        %v582 = vadd.f32 %v553, %v581
        %v583 = vpop.f32.mrf.mxu0
        %v584 = vadd.f32 %v555, %v583
        %585 = vdwg.mxu0
        %v586 = vadd.f32 %v344, %v567
        %v587 = vadd.f32 %v345, %v569
        %v588 = vadd.f32 %v346, %v572
        %v589 = vadd.f32 %v347, %v574
        %v590 = vadd.f32 %v348, %v577
        %v591 = vadd.f32 %v349, %v579
        %v592 = vadd.f32 %v350, %v582
        %v593 = vadd.f32 %v351, %v584
        %594 = vst [vmem:[#allocation2] sm:$0xff] %v586
        %595 = vst [vmem:[#allocation2 + $0x8] sm:$0xff] %v587
        %596 = vst [vmem:[#allocation2 + $0x10] sm:$0xff] %v588
        %597 = vst [vmem:[#allocation2 + $0x18] sm:$0xff] %v589
        %598 = vst [vmem:[#allocation2 + $0x20] sm:$0xff] %v590
        %599 = vst [vmem:[#allocation2 + $0x28] sm:$0xff] %v591
        %600 = vst [vmem:[#allocation2 + $0x30] sm:$0xff] %v592
        %601 = vst [vmem:[#allocation2 + $0x38] sm:$0xff] %v593
        %p602 = scmp.eq.s32.totalorder %s31, 1
        // Predicated region
        $region57: #{tpu_custom_call.1} parent=43 // pred_check
          %p603 = pneg %p602
        $region58: #{tpu_custom_call.1} parent=43 // pred_check_branch
          %605 = sbr.rel (%p603) target = $region60
        $region59: #{tpu_custom_call.1} parent=43 // pred_region
          %v606 = vld [vmem:[#allocation2] sm:$0xff]
          %v607 = vld [vmem:[#allocation2 + $0x8] sm:$0xff]
          %v608 = vld [vmem:[#allocation2 + $0x10] sm:$0xff]
          %v609 = vld [vmem:[#allocation2 + $0x18] sm:$0xff]
          %v610 = vld [vmem:[#allocation2 + $0x20] sm:$0xff]
          %v611 = vld [vmem:[#allocation2 + $0x28] sm:$0xff]
          %v612 = vld [vmem:[#allocation2 + $0x30] sm:$0xff]
          %v613 = vld [vmem:[#allocation2 + $0x38] sm:$0xff]
          %v614 = vld [vmem:[%s2] sm:$0x1]
          %v616 = vperm.slane %v614, 0
          %v618 = vmul.f32 %v606, %v616
          %v619 = vmul.f32 %v607, %v616
          %v620 = vmul.f32 %v608, %v616
          %v621 = vmul.f32 %v609, %v616
          %v622 = vmul.f32 %v610, %v616
          %v623 = vmul.f32 %v611, %v616
          %v624 = vmul.f32 %v612, %v616
          %v625 = vmul.f32 %v613, %v616
          %v626 = vld [vmem:[%s3] sm:$0x1]
          %v628 = vperm.slane %v626, 0
          %v630 = vadd.f32 %v618, %v628
          %v631 = vadd.f32 %v619, %v628
          %v632 = vadd.f32 %v620, %v628
          %v633 = vadd.f32 %v621, %v628
          %v634 = vadd.f32 %v622, %v628
          %v635 = vadd.f32 %v623, %v628
          %v636 = vadd.f32 %v624, %v628
          %v637 = vadd.f32 %v625, %v628
          %v638 = vmax.f32 %v630, 0.0
          %v639 = vmax.f32 %v631, 0.0
          %v640 = vmax.f32 %v632, 0.0
          %v641 = vmax.f32 %v633, 0.0
          %v642 = vmax.f32 %v634, 0.0
          %v643 = vmax.f32 %v635, 0.0
          %v644 = vmax.f32 %v636, 0.0
          %v645 = vmax.f32 %v637, 0.0
          %v646 = vadd.f32 %v638, %v639
          %v647 = vadd.f32 %v646, %v640
          %v648 = vadd.f32 %v647, %v641
          %v649 = vadd.f32 %v648, %v642
          %v650 = vadd.f32 %v649, %v643
          %v651 = vadd.f32 %v650, %v644
          %v652 = vadd.f32 %v651, %v645
          %v653 = vrot.slane %v652, 4
          %v654 = vadd.f32 %v652, %v653
          %v655 = vrot.slane %v654, 2
          %v656 = vadd.f32 %v654, %v655
          %v657 = vrot.slane %v656, 1
          %v658 = vadd.f32 %v656, %v657
          %v659 = vrcp.pop 64.0
          %v660 = vmul.f32 64.0, %v659
          %v661 = vsub.f32 1.0, %v660
          %v662 = vmul.f32 %v659, %v661
          %v663 = vadd.f32 %v659, %v662
          %vm664 = vweird.f32 %v659
          %v665 = vsel %vm664, %v659, %v663
          %v666 = vmul.f32 %v658, %v665
          %v667 = vmax.f32 %v638, %v642
          %v668 = vmax.f32 %v639, %v643
          %v669 = vmax.f32 %v640, %v644
          %v670 = vmax.f32 %v641, %v645
          %v671 = vmax.f32 %v667, %v668
          %v672 = vmax.f32 %v669, %v670
          %v673 = vmax.f32 %v671, %v672
          %v674 = vrot.slane %v673, 4
          %v675 = vmax.f32 %v673, %v674
          %v676 = vrot.slane %v675, 2
          %v677 = vmax.f32 %v675, %v676
          %v678 = vrot.slane %v677, 1
          %v679 = vmax.f32 %v677, %v678
          %vm680 = vcmask 1040384
          %v681 = vsel %vm680, %v666, %v679
          %v682 = vld [vmem:[%s4] sm:$0xff]
          %v683 = vld [vmem:[%s4 + $0x8] sm:$0xff]
          %v684 = vld [vmem:[%s4 + $0x10] sm:$0xff]
          %v685 = vld [vmem:[%s4 + $0x18] sm:$0xff]
          %v686 = vld [vmem:[%s4 + $0x20] sm:$0xff]
          %v687 = vld [vmem:[%s4 + $0x28] sm:$0xff]
          %v688 = vld [vmem:[%s4 + $0x30] sm:$0xff]
          %v689 = vld [vmem:[%s4 + $0x38] sm:$0xff]
          %v690 = vld [vmem:[%s4 + $0x40] sm:$0xff]
          %v691 = vld [vmem:[%s4 + $0x48] sm:$0xff]
          %v692 = vld [vmem:[%s4 + $0x50] sm:$0xff]
          %v693 = vld [vmem:[%s4 + $0x58] sm:$0xff]
          %v694 = vld [vmem:[%s4 + $0x60] sm:$0xff]
          %v695 = vld [vmem:[%s4 + $0x68] sm:$0xff]
          %v696 = vld [vmem:[%s4 + $0x70] sm:$0xff]
          %v697 = vld [vmem:[%s4 + $0x78] sm:$0xff]
          %698 = vmatpush.msra.mxu0 %v697
          %699 = vmatpush.msra.mxu0 %v696
          %700 = vmatpush.msra.mxu0 %v695
          %701 = vmatpush.msra.mxu0 %v694
          %702 = vmatpush.msra.mxu0 %v693
          %703 = vmatpush.msra.mxu0 %v692
          %704 = vmatpush.msra.mxu0 %v691
          %705 = vmatpush.msra.mxu0 %v690
          %706 = vmatpush.msra.mxu0 %v689
          %707 = vmatpush.msra.mxu0 %v688
          %708 = vmatpush.msra.mxu0 %v687
          %709 = vmatpush.msra.mxu0 %v686
          %710 = vmatpush.msra.mxu0 %v685
          %711 = vmatpush.msra.mxu0 %v684
          %712 = vmatpush.msra.mxu0 %v683
          %713 = vmatpush.msra.mxu0 %v682
          %714 = vmatmul.f32.gmra.mxu0 %v681
          %v715 = vpop.f32.mrf.mxu0
          %v716 = vadd.f32 0.0, %v715
          %717 = vdwg.mxu0
          %v718 = vmax.f32 %v716, 0.0
          %v719 = vld [vmem:[%s5] sm:$0xff]
          %vm720 = vcmask 64512
          %v722 = vsel %vm720, %v718, 0
          %724 = vmatpush.msra.mxu0 0.0
          %725 = vmatpush.msra.mxu0 0.0
          %726 = vmatpush.msra.mxu0 0.0
          %727 = vmatpush.msra.mxu0 0.0
          %728 = vmatpush.msra.mxu0 0.0
          %729 = vmatpush.msra.mxu0 0.0
          %730 = vmatpush.msra.mxu0 0.0
          %731 = vmatpush.msra.mxu0 0.0
          %732 = vmatpush.msra.mxu0 0.0
          %733 = vmatpush.msra.mxu0 0.0
          %734 = vmatpush.msra.mxu0 0.0
          %735 = vmatpush.msra.mxu0 0.0
          %736 = vmatpush.msra.mxu0 0.0
          %737 = vmatpush.msra.mxu0 0.0
          %738 = vmatpush.msra.mxu0 0.0
          %739 = vmatpush.msra.mxu0 %v719
          %740 = vmatmul.f32.gmra.mxu0 %v722
          %v741 = vpop.f32.mrf.mxu0
          %v742 = vadd.f32 0.0, %v741
          %743 = vdwg.mxu0
          %vm744 = vcmask 1041408
          %v745 = vsel %vm744, %v742, 0.0
          %v746 = vrot.slane %v745, 4
          %v747 = vadd.f32 %v745, %v746
          %v748 = vrot.slane %v747, 2
          %v749 = vadd.f32 %v747, %v748
          %v750 = vrot.slane %v749, 1
          %v751 = vadd.f32 %v749, %v750
          %v752 = vxor.u32 %v751, 2147483648
          %v753 = vmul.f32 %v752, 1.442695
          %v754 = vpow.pop %v753
          %v755 = vadd.f32 %v754, 1.0
          %v756 = vrcp.pop %v755
          %v757 = vmul.f32 %v755, %v756
          %v758 = vsub.f32 1.0, %v757
          %v759 = vmul.f32 %v756, %v758
          %v760 = vadd.f32 %v756, %v759
          %vm761 = vweird.f32 %v755
          %vm762 = vweird.f32 %v756
          %vm763 = vmor %vm761, %vm762
          %v764 = vsel %vm763, %v756, %v760
          %v765 = vand.u32 2147483647, %v755
          %vm766 = vcmp.eq.f32.partialorder %v765, 8.507059e+37
          %v767 = vand.u32 %v755, 2147483648
          %v768 = vor.u32 1.1754944e-38, %v767
          %v769 = vsel %vm766, %v768, %v764
          %v770 = vmul.f32 1.0, %v769
          %v771 = vadd.f32 %v770, 1.0
          %v772 = vmul.f32 %v638, %v771
          %v773 = vmul.f32 %v639, %v771
          %v774 = vmul.f32 %v640, %v771
          %v775 = vmul.f32 %v641, %v771
          %v776 = vmul.f32 %v642, %v771
          %v777 = vmul.f32 %v643, %v771
          %v778 = vmul.f32 %v644, %v771
          %v779 = vmul.f32 %v645, %v771
          %780 = vst [vmem:[%s329] sm:$0xff] %v772
          %781 = vst [vmem:[%s329 + $0x8] sm:$0xff] %v773
          %782 = vst [vmem:[%s329 + $0x10] sm:$0xff] %v774
          %783 = vst [vmem:[%s329 + $0x18] sm:$0xff] %v775
          %784 = vst [vmem:[%s329 + $0x20] sm:$0xff] %v776
          %785 = vst [vmem:[%s329 + $0x28] sm:$0xff] %v777
          %786 = vst [vmem:[%s329 + $0x30] sm:$0xff] %v778
          %787 = vst [vmem:[%s329 + $0x38] sm:$0xff] %v779
        $region60: #{tpu_custom_call.1} parent=43 // pred_fallthru
          _
        %s788 = sand.u32 %s184, 1
        %s789 = scalar_lea.sflag [#allocation5], %s788
        %s790 = sand.u32 %s184, 1
        %s791 = smul.addr %s790, 64
        %s792 = scalar_lea.vmem [#allocation8], %s791
        // Predicated region
        $region61: #{tpu_custom_call.1} parent=43 // pred_check
          %p793 = pneg %p194
        $region62: #{tpu_custom_call.1} parent=43 // pred_check_branch
          %795 = sbr.rel (%p793) target = $region64
        $region63: #{tpu_custom_call.1} parent=43 // pred_region
          %797 = vsyncadd %s789, 0
          %s798 = smul.addr %s30, 8
          %s799 = smul.addr %s798, 8
          %s800 = scalar_lea.hbm %s6, %s799
          %s801 = sshll.u32 %s792, 4
          %s802 = int_to_ptr.vmem [resolvable:$true] %s801
          %s803 = sshll.u32 %s800, 4
          %s804 = int_to_ptr.hbm [resolvable:$true] %s803
          %809 = dma.vmem_to_hbm [thread:$0]  %s802, 1024, %s804, %s789, 128, 128, 8
        $region64: #{tpu_custom_call.1} parent=43 // pred_fallthru
          _
      $region44: #{tpu_custom_call.1} parent=5 // pred_fallthru
        _
      %p810 = scmp.le.s32.totalorder 2, %s21
      // Predicated region
      $region65: #{tpu_custom_call.1} parent=5 // pred_check
        %p811 = pneg %p810
      $region66: #{tpu_custom_call.1} parent=5 // pred_check_branch
        %813 = sbr.rel (%p811) target = $region68
      $region67: #{tpu_custom_call.1} parent=5 // pred_region
        %s814 = ssub.s32 %s21, 2
        // Predicated region
        $region69: #{tpu_custom_call.1} parent=67 // pred_check
          %p815 = pneg %p200
        $region70: #{tpu_custom_call.1} parent=67 // pred_check_branch
          %817 = sbr.rel (%p815) target = $region72
        $region71: #{tpu_custom_call.1} parent=67 // pred_region
          %s818 = sand.u32 %s185, 1
          %s819 = scalar_lea.sflag [#allocation5], %s818
          %s820 = sand.u32 %s185, 1
          %s821 = smul.addr %s820, 64
          %s822 = scalar_lea.vmem [#allocation8], %s821
          %824 = dma.done %s819, 1024
        $region72: #{tpu_custom_call.1} parent=67 // pred_fallthru
          _
      $region68: #{tpu_custom_call.1} parent=5 // pred_fallthru
        _
    $region6: #{tpu_custom_call.1} parent=1 // loop_footer
      %s25 = sadd.s32 1, %s21
    $region7: #{tpu_custom_call.1} parent=1 // loop_footer_branch
      %20 = sbr.rel target = $region3
    $region8: #{tpu_custom_call.1} parent=1 // loop_exit
      _
    %825 = vsyncpa [#allocation4], 1
    %s826 = scalar_lea.sflag [#allocation4], 1
    %827 = vsyncpa %s826, 1
    %828 = vsyncpa [#allocation7], 1
    %s829 = scalar_lea.sflag [#allocation7], 1
    %830 = vsyncpa %s829, 1
    %831 = vsyncpa [#allocation5], 1
    %s832 = scalar_lea.sflag [#allocation5], 1
    %833 = vsyncpa %s832, 1

</llo_original>
